<compile_context>
chip_gen: v7x
topology: tpu7x:2x2x1
jax: 0.10.0
libtpu: 0.0.40
codegen_flags: <defaults>
</compile_context>

<pallas_src>
import numpy as np
import jax
import jax.numpy as jnp
from jax.experimental import pallas as pl
from jax.experimental.pallas import tpu as pltpu


# ----------------------------------------------------------------------------
# Kernel A: spectral projection + diffusion coefficients
#   acc += evecs_b[blk]^T @ (mass_diag_b[blk] * x_b[blk]) over vertex blocks,
#   finalized with precomputed exp(-evals * t) coefficients.
# ----------------------------------------------------------------------------
def _spectral_diffuse_kernel(coefs_ref, x_ref, mass_ref, evecs_ref,
                             dspec_ref, acc_ref):
    i = pl.program_id(2)

    @pl.when(i == 0)
    def _init():
        acc_ref[...] = jnp.zeros_like(acc_ref)

    # VPU: lumped-mass scale (tv, td); keep the MXU operands bf16.
    mx = (mass_ref[...] * x_ref[...]).astype(jnp.bfloat16)
    # MXU: contract over the vertex axis: (tv, K) x (tv, td) -> (K, td)
    acc_ref[...] += jax.lax.dot_general(
        evecs_ref[...], mx, (((0,), (0,)), ((), ())),
        preferred_element_type=jnp.float32)

    @pl.when(i == pl.num_programs(2) - 1)
    def _finalize():
        dspec_ref[...] = (coefs_ref[...] * acc_ref[...]).astype(dspec_ref.dtype)


# ----------------------------------------------------------------------------
# Kernel B: back to vertex basis   out[b, blk] = evecs_b[blk] @ dspec_b
# ----------------------------------------------------------------------------
def _to_vertex_kernel(evecs_ref, dspec_ref, out_ref):
    out_ref[...] = jnp.dot(evecs_ref[...], dspec_ref[...],
                           preferred_element_type=jnp.float32
                           ).astype(out_ref.dtype)


def _pick_block_v(v):
    # Largest convenient vertex tile dividing V (amortizes per-step overhead);
    # falls back to the full dim (always a legal block).
    for tv in (1024, 512, 256, 128):
        if v % tv == 0:
            return tv
    return v


def _round_up(x, m):
    return ((x + m - 1) // m) * m


# ----------------------------------------------------------------------------
# Wrapper reproducing LearnedTimeDiffusionSNK.forward (lumped-mass case)
# ----------------------------------------------------------------------------
def learned_time_diffusion_snk(diffusion_time, x, mass_diag, evals, evecs,
                               batch, *, block_v=None, block_d=None):
    """x: (Vt, D), mass_diag: (Vt,) lumped mass, evals: (B*K,),
    evecs: (Vt, K), batch: (Vt,) int, diffusion_time: (D,). Returns (Vt, D)."""
    batch = np.asarray(batch)
    bs = int(batch.max()) + 1
    Vt, D = int(x.shape[0]), int(x.shape[1])
    K = int(evals.shape[0]) // bs
    assert Vt % bs == 0, "equal-size batch segments expected"
    V = Vt // bs
    # TODO(synk): ragged (unequal-size) batch segments from unbatch/grouped_matmul
    assert np.array_equal(batch, np.repeat(np.arange(bs), V)), \
        "contiguous equal-size batch segments expected"

    # Lane-dense channel dim (pad with zero channels, sliced off at the end).
    Dp = max(128, _round_up(D, 128))
    td = block_d if block_d is not None else (Dp if Dp <= 256 else 256)
    assert Dp % td == 0 and td % 128 == 0
    nD = Dp // td
    tv = block_v if (block_v is not None and V % block_v == 0) else _pick_block_v(V)
    nvb = V // tv

    # Host-side prep: clamp times, precompute diffusion coefficients (f32),
    # pad channels, cast heavy streams to bf16.
    t = jnp.maximum(jnp.asarray(diffusion_time, jnp.float32), 1e-8)
    if Dp > D:
        t = jnp.pad(t, (0, Dp - D), constant_values=1e-8)
    evals_b = jnp.asarray(evals, jnp.float32).reshape(bs, K)
    coefs = jnp.exp(-evals_b[:, :, None] * t[None, None, :])        # (bs, K, Dp)

    x_f = jnp.asarray(x, jnp.float32)
    if Dp > D:
        x_f = jnp.pad(x_f, ((0, 0), (0, Dp - D)))
    x_b = x_f.astype(jnp.bfloat16).reshape(bs, V, Dp)                # (bs, V, Dp)
    evecs_b = jnp.asarray(evecs, jnp.bfloat16).reshape(bs, V, K)     # (bs, V, K)
    mass_b = jnp.asarray(mass_diag, jnp.float32).reshape(bs, V, 1)   # (bs, V, 1)

    # --- Kernel A: diffused spectral coefficients (bs, K, Dp), bf16 --------
    dspec = pl.pallas_call(
        _spectral_diffuse_kernel,
        out_shape=jax.ShapeDtypeStruct((bs, K, Dp), jnp.bfloat16),
        grid=(bs, nD, nvb),
        in_specs=[
            pl.BlockSpec((None, K, td), lambda b, d, i: (b, 0, d)),   # coefs
            pl.BlockSpec((None, tv, td), lambda b, d, i: (b, i, d)),  # x
            pl.BlockSpec((None, tv, 1), lambda b, d, i: (b, i, 0)),   # mass diag
            pl.BlockSpec((None, tv, K), lambda b, d, i: (b, i, 0)),   # evecs
        ],
        out_specs=pl.BlockSpec((None, K, td), lambda b, d, i: (b, 0, d)),
        scratch_shapes=[pltpu.VMEM((K, td), jnp.float32)],
        compiler_params=pltpu.CompilerParams(
            dimension_semantics=("parallel", "parallel", "arbitrary")),
    )(coefs, x_b, mass_b, evecs_b)

    # --- Kernel B: back to vertex basis (bs, V, Dp), f32 --------------------
    x_diffuse = pl.pallas_call(
        _to_vertex_kernel,
        out_shape=jax.ShapeDtypeStruct((bs, V, Dp), jnp.float32),
        grid=(bs, nvb),
        in_specs=[
            pl.BlockSpec((None, tv, K), lambda b, i: (b, i, 0)),      # evecs rows
            pl.BlockSpec((None, K, Dp), lambda b, i: (b, 0, 0)),      # dspec
        ],
        out_specs=pl.BlockSpec((None, tv, Dp), lambda b, i: (b, i, 0)),
        compiler_params=pltpu.CompilerParams(
            dimension_semantics=("parallel", "parallel")),
    )(evecs_b, dspec)

    return x_diffuse.reshape(Vt, Dp)[:, :D]


# ----------------------------------------------------------------------------
# Pure-numpy reference mirroring the PyTorch forward (lumped mass)
# ----------------------------------------------------------------------------
def reference_forward(diffusion_time, x, mass_diag, evals, evecs, batch):
    t = np.maximum(np.asarray(diffusion_time, np.float64), 1e-8)
    xn = np.asarray(x, np.float64)
    mn = np.asarray(mass_diag, np.float64)
    en = np.asarray(evals, np.float64)
    pn = np.asarray(evecs, np.float64)
    batch = np.asarray(batch)
    bs = int(batch.max()) + 1
    K = en.shape[0] // bs
    outs = []
    for b in range(bs):
        idx = np.where(batch == b)[0]
        # (massvec^T @ evecs)^T @ x  with diagonal mass == evecs^T @ (m * x)
        x_spec = pn[idx].T @ (mn[idx, None] * xn[idx])           # (K, D)
        coefs = np.exp(-en[b * K:(b + 1) * K, None] * t[None, :])
        outs.append(pn[idx] @ (coefs * x_spec))                  # (V_b, D)
    return np.concatenate(outs, axis=0)


if __name__ == "__main__":
    key = jax.random.PRNGKey(0)
    bs, V, K, D = 2, 256, 32, 32            # B meshes, V verts each, K eigs, C_inout
    Vt = bs * V

    k1, k2, k3, k4, k5 = jax.random.split(key, 5)
    x = jax.random.normal(k1, (Vt, D), jnp.float32)
    evecs = jax.random.normal(k2, (Vt, K), jnp.float32) / np.sqrt(V)
    evals = jnp.sort(jax.random.uniform(k3, (bs, K), jnp.float32, 0.0, 10.0),
                     axis=1).reshape(-1)                             # (bs*K,)
    # learned per-channel times; includes negatives to exercise the 1e-8 clamp
    diffusion_time = 0.1 + 0.5 * jax.random.normal(k4, (D,), jnp.float32)
    # lumped (diagonal) mass vector, as used by DiffusionNet in practice
    mass_diag = jax.random.uniform(k5, (Vt,), jnp.float32, 0.5, 1.5)

    batch = np.repeat(np.arange(bs), V).astype(np.int32)

    out = learned_time_diffusion_snk(diffusion_time, x, mass_diag, evals,
                                     evecs, batch, block_v=128)
    out = jax.block_until_ready(out)

    ref = reference_forward(diffusion_time, x, mass_diag, evals, evecs, batch)
    assert out.shape == (Vt, D), out.shape
    err = float(np.max(np.abs(np.asarray(out, np.float64) - ref)))
    assert np.allclose(np.asarray(out, np.float64), ref, rtol=5e-2, atol=2e-2), err
    print("KERNEL_OK")
</pallas_src>

<mosaic_0001>
module attributes {stable_mosaic.version = 11 : i64} {
  func.func @_spectral_diffuse_kernel(%arg0: i32, %arg1: i32, %arg2: i32, %arg3: memref<1x32x128xf32, #tpu.memory_space<vmem>>, %arg4: memref<1x128x128xbf16, #tpu.memory_space<vmem>>, %arg5: memref<1x128x1xf32, #tpu.memory_space<vmem>>, %arg6: memref<1x128x32xbf16, #tpu.memory_space<vmem>>, %arg7: memref<1x32x128xbf16, #tpu.memory_space<vmem>>, %arg8: memref<32x128xf32, #tpu.memory_space<vmem>>) attributes {dimension_semantics = [#tpu.dimension_semantics<parallel>, #tpu.dimension_semantics<parallel>, #tpu.dimension_semantics<arbitrary>], iteration_bounds = array<i64: 2, 1, 2>, scalar_prefetch = 0 : i64, scratch_operands = 1 : i64, tpu.core_type = #tpu.core_type<tc>, window_params = [{transform_indices = @transform_0, window_bounds = array<i64: 1, 32, 128>}, {transform_indices = @transform_1, window_bounds = array<i64: 1, 128, 128>}, {transform_indices = @transform_2, window_bounds = array<i64: 1, 128, 1>}, {transform_indices = @transform_3, window_bounds = array<i64: 1, 128, 32>}, {transform_indices = @transform_4, window_bounds = array<i64: 1, 32, 128>}]} {
    %c0_i32 = arith.constant 0 : i32
    %0 = arith.cmpi eq, %arg2, %c0_i32 : i32
    %1 = arith.extui %0 : i1 to i32
    %c0_i32_0 = arith.constant 0 : i32
    %2 = arith.cmpi ne, %1, %c0_i32_0 : i32
    scf.if %2 {
      %cst_14 = arith.constant 0.000000e+00 : f32
      %20 = vector.broadcast %cst_14 : f32 to vector<32x128xf32>
      %c0_15 = arith.constant 0 : index
      %c0_16 = arith.constant 0 : index
      %21 = vector.load %arg8[%c0_15, %c0_16] : memref<32x128xf32, #tpu.memory_space<vmem>>, vector<32x128xf32>
      tpu.vector_store %arg8[%c0_15, %c0_16], %20 {strides = array<i32>} : memref<32x128xf32, #tpu.memory_space<vmem>>, vector<32x128xf32>,
    } else {
    }
    %c0 = arith.constant 0 : index
    %c0_1 = arith.constant 0 : index
    %c0_2 = arith.constant 0 : index
    %3 = vector.load %arg5[%c0, %c0_1, %c0_2] : memref<1x128x1xf32, #tpu.memory_space<vmem>>, vector<1x128x1xf32>
    %4 = vector.shape_cast %3 : vector<1x128x1xf32> to vector<128x1xf32>
    %c0_3 = arith.constant 0 : index
    %c0_4 = arith.constant 0 : index
    %c0_5 = arith.constant 0 : index
    %5 = vector.load %arg4[%c0_3, %c0_4, %c0_5] : memref<1x128x128xbf16, #tpu.memory_space<vmem>>, vector<1x128x128xbf16>
    %6 = vector.shape_cast %5 : vector<1x128x128xbf16> to vector<128x128xbf16>
    %7 = arith.extf %6 : vector<128x128xbf16> to vector<128x128xf32>
    %8 = vector.broadcast %4 : vector<128x1xf32> to vector<128x128xf32>
    %9 = arith.mulf %8, %7 : vector<128x128xf32>
    %10 = arith.truncf %9 : vector<128x128xf32> to vector<128x128xbf16>
    %c0_6 = arith.constant 0 : index
    %c0_7 = arith.constant 0 : index
    %11 = vector.load %arg8[%c0_6, %c0_7] : memref<32x128xf32, #tpu.memory_space<vmem>>, vector<32x128xf32>
    %c0_8 = arith.constant 0 : index
    %c0_9 = arith.constant 0 : index
    %c0_10 = arith.constant 0 : index
    %12 = vector.load %arg6[%c0_8, %c0_9, %c0_10] : memref<1x128x32xbf16, #tpu.memory_space<vmem>>, vector<1x128x32xbf16>
    %13 = vector.shape_cast %12 : vector<1x128x32xbf16> to vector<128x32xbf16>
    %cst = arith.constant dense<0.000000e+00> : vector<32x128xf32>
    %14 = tpu.matmul %13, %10, %cst {dimension_numbers = #tpu.dot_dimension_numbers<[0], [0], [1], [1], [0, 1, 1, 1], [], []>} : vector<128x32xbf16>, vector<128x128xbf16>, vector<32x128xf32> -> vector<32x128xf32>
    %15 = arith.addf %11, %14 : vector<32x128xf32>
    %c0_11 = arith.constant 0 : index
    %c0_12 = arith.constant 0 : index
    %16 = vector.load %arg8[%c0_11, %c0_12] : memref<32x128xf32, #tpu.memory_space<vmem>>, vector<32x128xf32>
    tpu.vector_store %arg8[%c0_11, %c0_12], %15 {strides = array<i32>} : memref<32x128xf32, #tpu.memory_space<vmem>>, vector<32x128xf32>,
    %c1_i32 = arith.constant 1 : i32
    %17 = arith.cmpi eq, %arg2, %c1_i32 : i32
    %18 = arith.extui %17 : i1 to i32
    %c0_i32_13 = arith.constant 0 : i32
    %19 = arith.cmpi ne, %18, %c0_i32_13 : i32
    scf.if %19 {
      %c0_14 = arith.constant 0 : index
      %c0_15 = arith.constant 0 : index
      %c0_16 = arith.constant 0 : index
      %20 = vector.load %arg3[%c0_14, %c0_15, %c0_16] : memref<1x32x128xf32, #tpu.memory_space<vmem>>, vector<1x32x128xf32>
      %21 = vector.shape_cast %20 : vector<1x32x128xf32> to vector<32x128xf32>
      %c0_17 = arith.constant 0 : index
      %c0_18 = arith.constant 0 : index
      %22 = vector.load %arg8[%c0_17, %c0_18] : memref<32x128xf32, #tpu.memory_space<vmem>>, vector<32x128xf32>
      %23 = arith.mulf %21, %22 : vector<32x128xf32>
      %24 = arith.truncf %23 : vector<32x128xf32> to vector<32x128xbf16>
      %c0_19 = arith.constant 0 : index
      %c0_20 = arith.constant 0 : index
      %c0_21 = arith.constant 0 : index
      %25 = vector.load %arg7[%c0_19, %c0_20, %c0_21] : memref<1x32x128xbf16, #tpu.memory_space<vmem>>, vector<1x32x128xbf16>
      %26 = vector.shape_cast %25 : vector<1x32x128xbf16> to vector<32x128xbf16>
      %27 = vector.shape_cast %24 : vector<32x128xbf16> to vector<1x32x128xbf16>
      tpu.vector_store %arg7[%c0_19, %c0_20, %c0_21], %27 {strides = array<i32>} : memref<1x32x128xbf16, #tpu.memory_space<vmem>>, vector<1x32x128xbf16>,
    } else {
    }
    return
  }
  func.func @transform_0(%arg0: i32, %arg1: i32, %arg2: i32) -> (i32, i32, i32) {
    %c0_i32 = arith.constant 0 : i32
    %c0_i32_0 = arith.constant 0 : i32
    return %arg0, %c0_i32, %arg1 : i32, i32, i32
  }
  func.func @transform_1(%arg0: i32, %arg1: i32, %arg2: i32) -> (i32, i32, i32) {
    %c0_i32 = arith.constant 0 : i32
    return %arg0, %arg2, %arg1 : i32, i32, i32
  }
  func.func @transform_2(%arg0: i32, %arg1: i32, %arg2: i32) -> (i32, i32, i32) {
    %c0_i32 = arith.constant 0 : i32
    %c0_i32_0 = arith.constant 0 : i32
    return %arg0, %arg2, %c0_i32 : i32, i32, i32
  }
  func.func @transform_3(%arg0: i32, %arg1: i32, %arg2: i32) -> (i32, i32, i32) {
    %c0_i32 = arith.constant 0 : i32
    %c0_i32_0 = arith.constant 0 : i32
    return %arg0, %arg2, %c0_i32 : i32, i32, i32
  }
  func.func @transform_4(%arg0: i32, %arg1: i32, %arg2: i32) -> (i32, i32, i32) {
    %c0_i32 = arith.constant 0 : i32
    %c0_i32_0 = arith.constant 0 : i32
    return %arg0, %c0_i32, %arg1 : i32, i32, i32
  }
}

</mosaic_0001>

<llo_original>
// kernel: tpu_custom_call.1
$region0: #{tpu_custom_call.1}
  #allocation0 [shape = 'u32[]', space=smem, size = 0x4, offset = 0x4, fixed_abs, tag = 'smem constant byte address 0x4 - core index']
  #allocation1 [shape = 'u32[144,128]{1,0:T(1,128)}', space=vmem, size = 0x12000, scoped, tag = 'internal scratch']
  #allocation2 [shape = 'f32[32,128]{1,0:T(8,128)}', space=vmem, size = 0x4000, scoped, tag = 'scratch operand']
  %s0 = inlined_call_operand.vmem [shape: f32[2,32,128], index: 0, kind: input, shape index: {}]
  %s1 = inlined_call_operand.vmem [shape: bf16[2,256,128], index: 1, kind: input, shape index: {}]
  %s2 = inlined_call_operand.vmem [shape: f32[2,256,1], index: 2, kind: input, shape index: {}]
  %s3 = inlined_call_operand.vmem [shape: bf16[2,256,32], index: 3, kind: input, shape index: {}]
  %s4 = inlined_call_operand.hbm [shape: bf16[2,32,128], index: 4, kind: output, shape index: {}]
  %s5 = sld [smem:[#allocation0]]
  $region57: #{tpu_custom_call.1} parent=0
    _
  %s7 = ssub.s32 1, %s5
  %s8 = scalar_select 0, %s7, %s5
  $region1: #{tpu_custom_call.1} parent=0
    #allocation3 [shape = 'u8[16384]{0}', space=vmem, size = 0x4000, scoped, tag = 'output window, operand 0']
    #allocation4 [shape = 's32[2]{0}', space=sflag, size = 0x8, scoped, tag = 'scoped memory for tpu_custom_call.1']
    %9 = vsyncpa [#allocation4], 0
    %s10 = scalar_lea.sflag [#allocation4], 1
    %11 = vsyncpa %s10, 0
    loop: start=0, step=1, limit=6
    $region2: #{tpu_custom_call.1} parent=1 // loop_pre_header
      _
    $region3: #{tpu_custom_call.1} parent=1 // loop_header
      %s13 = sphi 0, %s17
      %p14 = scmp.ge.s32.totalorder %s13, 6
      %s20 = sphi 0, %s39
      %s21 = sphi 0, %s35
      %s22 = sphi 0, %s31
      %s23 = sphi 0, %s20
      %s24 = sphi 0, %s21
      %s25 = sphi 0, %s22
      %s26 = sphi 0, %s23
      %s27 = sphi 0, %s24
      %s28 = sphi 0, %s25
      %s44 = sphi 0, %s46
      %s47 = sphi 0, %s44
      %s48 = sphi 0, %s47
      %s64 = sphi 0, %s48
      %s74 = sphi 0, %s76
      %s77 = sphi 0, %s74
      %s78 = sphi 0, %s77
      %s94 = sphi 0, %s78
      %s102 = sphi 0, %s104
      %s105 = sphi 0, %s102
      %s106 = sphi 0, %s105
      %s122 = sphi 0, %s106
      %s130 = sphi 0, %s132
      %s133 = sphi 0, %s130
      %s134 = sphi 0, %s133
      %s150 = sphi 0, %s134
      %s158 = sphi 0, %s160
      %s161 = sphi 0, %s158
      %s162 = sphi 0, %s161
      %s178 = sphi 0, %s162
    $region4: #{tpu_custom_call.1} parent=1 // loop_header_branch
      %16 = sbr.rel (%p14) target = $region8
    $region5: #{tpu_custom_call.1} parent=1 // loop_body
      %s18 = ssub.s32 %s13, 1
      %s19 = ssub.s32 %s13, 2
      %s29 = sadd.s32 1, %s22
      %p30 = scmp.ge.s32.totalorder %s29, 2
      %s31 = scalar_select %p30, 0, %s29
      %s32 = sadd.s32 1, %s21
      %s33 = scalar_select %p30, %s32, %s21
      %p34 = scmp.ge.s32.totalorder %s33, 1
      %s35 = scalar_select %p34, 0, %s33
      %s36 = sadd.s32 1, %s20
      %s37 = scalar_select %p34, %s36, %s20
      %p38 = scmp.ge.s32.totalorder %s37, 2
      %s39 = scalar_select %p38, 0, %s37
      %s40 = ssub.s32 %s20, %s39
      %s41 = ssub.s32 %s21, %s35
      %s42 = sor.u32 %s40, %s41
      %p43 = scmp.eq.s32.totalorder %s42, 0
      %s45 = sadd.s32 %s44, 1
      %s46 = scalar_select %p43, %s44, %s45
      %p49 = pneg %p43
      %p50 = scmp.eq.s32.totalorder %s13, 3
      %p51 = por %p49, %p50
      %p52 = scmp.ne.s32.totalorder %s44, %s47
      %p53 = scmp.eq.s32.totalorder %s13, 0
      %p54 = por %p52, %p53
      %p55 = scmp.ne.s32.totalorder %s44, %s47
      %p56 = scmp.eq.s32.totalorder %s18, 3
      %p57 = por %p55, %p56
      %p58 = scmp.ne.s32.totalorder %s47, %s48
      %p59 = scmp.eq.s32.totalorder %s18, 0
      %p60 = por %p58, %p59
      %p61 = scmp.ne.s32.totalorder %s47, %s48
      %p62 = scmp.eq.s32.totalorder %s19, 3
      %p63 = por %p61, %p62
      %p65 = scmp.ne.s32.totalorder %s48, %s64
      %p66 = scmp.eq.s32.totalorder %s19, 0
      %p67 = por %p65, %p66
      %s68 = ssub.s32 %s20, %s39
      %s69 = ssub.s32 %s22, %s31
      %s70 = sor.u32 %s68, %s69
      %s71 = ssub.s32 %s21, %s35
      %s72 = sor.u32 %s70, %s71
      %p73 = scmp.eq.s32.totalorder %s72, 0
      %s75 = sadd.s32 %s74, 1
      %s76 = scalar_select %p73, %s74, %s75
      %p79 = pneg %p73
      %p80 = scmp.eq.s32.totalorder %s13, 3
      %p81 = por %p79, %p80
      %p82 = scmp.ne.s32.totalorder %s74, %s77
      %p83 = scmp.eq.s32.totalorder %s13, 0
      %p84 = por %p82, %p83
      %p85 = scmp.ne.s32.totalorder %s74, %s77
      %p86 = scmp.eq.s32.totalorder %s18, 3
      %p87 = por %p85, %p86
      %p88 = scmp.ne.s32.totalorder %s77, %s78
      %p89 = scmp.eq.s32.totalorder %s18, 0
      %p90 = por %p88, %p89
      %p91 = scmp.ne.s32.totalorder %s77, %s78
      %p92 = scmp.eq.s32.totalorder %s19, 3
      %p93 = por %p91, %p92
      %p95 = scmp.ne.s32.totalorder %s78, %s94
      %p96 = scmp.eq.s32.totalorder %s19, 0
      %p97 = por %p95, %p96
      %s98 = ssub.s32 %s20, %s39
      %s99 = ssub.s32 %s22, %s31
      %s100 = sor.u32 %s98, %s99
      %p101 = scmp.eq.s32.totalorder %s100, 0
      %s103 = sadd.s32 %s102, 1
      %s104 = scalar_select %p101, %s102, %s103
      %p107 = pneg %p101
      %p108 = scmp.eq.s32.totalorder %s13, 3
      %p109 = por %p107, %p108
      %p110 = scmp.ne.s32.totalorder %s102, %s105
      %p111 = scmp.eq.s32.totalorder %s13, 0
      %p112 = por %p110, %p111
      %p113 = scmp.ne.s32.totalorder %s102, %s105
      %p114 = scmp.eq.s32.totalorder %s18, 3
      %p115 = por %p113, %p114
      %p116 = scmp.ne.s32.totalorder %s105, %s106
      %p117 = scmp.eq.s32.totalorder %s18, 0
      %p118 = por %p116, %p117
      %p119 = scmp.ne.s32.totalorder %s105, %s106
      %p120 = scmp.eq.s32.totalorder %s19, 3
      %p121 = por %p119, %p120
      %p123 = scmp.ne.s32.totalorder %s106, %s122
      %p124 = scmp.eq.s32.totalorder %s19, 0
      %p125 = por %p123, %p124
      %s126 = ssub.s32 %s20, %s39
      %s127 = ssub.s32 %s22, %s31
      %s128 = sor.u32 %s126, %s127
      %p129 = scmp.eq.s32.totalorder %s128, 0
      %s131 = sadd.s32 %s130, 1
      %s132 = scalar_select %p129, %s130, %s131
      %p135 = pneg %p129
      %p136 = scmp.eq.s32.totalorder %s13, 3
      %p137 = por %p135, %p136
      %p138 = scmp.ne.s32.totalorder %s130, %s133
      %p139 = scmp.eq.s32.totalorder %s13, 0
      %p140 = por %p138, %p139
      %p141 = scmp.ne.s32.totalorder %s130, %s133
      %p142 = scmp.eq.s32.totalorder %s18, 3
      %p143 = por %p141, %p142
      %p144 = scmp.ne.s32.totalorder %s133, %s134
      %p145 = scmp.eq.s32.totalorder %s18, 0
      %p146 = por %p144, %p145
      %p147 = scmp.ne.s32.totalorder %s133, %s134
      %p148 = scmp.eq.s32.totalorder %s19, 3
      %p149 = por %p147, %p148
      %p151 = scmp.ne.s32.totalorder %s134, %s150
      %p152 = scmp.eq.s32.totalorder %s19, 0
      %p153 = por %p151, %p152
      %s154 = ssub.s32 %s20, %s39
      %s155 = ssub.s32 %s21, %s35
      %s156 = sor.u32 %s154, %s155
      %p157 = scmp.eq.s32.totalorder %s156, 0
      %s159 = sadd.s32 %s158, 1
      %s160 = scalar_select %p157, %s158, %s159
      %p163 = pneg %p157
      %p164 = scmp.eq.s32.totalorder %s13, 3
      %p165 = por %p163, %p164
      %p166 = scmp.ne.s32.totalorder %s158, %s161
      %p167 = scmp.eq.s32.totalorder %s13, 0
      %p168 = por %p166, %p167
      %p169 = scmp.ne.s32.totalorder %s158, %s161
      %p170 = scmp.eq.s32.totalorder %s18, 3
      %p171 = por %p169, %p170
      %p172 = scmp.ne.s32.totalorder %s161, %s162
      %p173 = scmp.eq.s32.totalorder %s18, 0
      %p174 = por %p172, %p173
      %p175 = scmp.ne.s32.totalorder %s161, %s162
      %p176 = scmp.eq.s32.totalorder %s19, 3
      %p177 = por %p175, %p176
      %p179 = scmp.ne.s32.totalorder %s162, %s178
      %p180 = scmp.eq.s32.totalorder %s19, 0
      %p181 = por %p179, %p180
      %p182 = scmp.le.s32.totalorder 1, %s13
      %p183 = scmp.lt.s32.totalorder %s13, 5
      %p184 = pnand %p182, %p183
      %p185 = pneg %p184
      // Predicated region
      $region9: #{tpu_custom_call.1} parent=5 // pred_check
        _
      $region10: #{tpu_custom_call.1} parent=5 // pred_check_branch
        %187 = sbr.rel (%p184) target = $region12
      $region11: #{tpu_custom_call.1} parent=5 // pred_region
        %s188 = ssub.s32 %s13, 1
      $region12: #{tpu_custom_call.1} parent=5 // pred_fallthru
        _
      %p189 = scmp.lt.s32.totalorder %s13, 4
      // Predicated region
      $region13: #{tpu_custom_call.1} parent=5 // pred_check
        %p190 = pneg %p189
      $region14: #{tpu_custom_call.1} parent=5 // pred_check_branch
        %192 = sbr.rel (%p190) target = $region16
      $region15: #{tpu_custom_call.1} parent=5 // pred_region
        // Predicated region
        $region17: #{tpu_custom_call.1} parent=15 // pred_check
          %p193 = pneg %p54
        $region18: #{tpu_custom_call.1} parent=15 // pred_check_branch
          %195 = sbr.rel (%p193) target = $region20
        $region19: #{tpu_custom_call.1} parent=15 // pred_region
          %p196 = scmp.lt.s32.totalorder %s20, 1
          %s197 = scalar_select %p196, %s20, 1
          %p198 = scmp.lt.s32.totalorder %s21, 0
          %s199 = scalar_select %p198, %s21, 0
          %s200 = smul.addr %s197, 4
          %s201 = sadd.s32 %s199, %s200
          %s202 = smul.addr %s201, 8
          %s203 = scalar_lea.vmem %s0, %s202
        $region20: #{tpu_custom_call.1} parent=15 // pred_fallthru
          _
        // Predicated region
        $region21: #{tpu_custom_call.1} parent=15 // pred_check
          %p204 = pneg %p84
        $region22: #{tpu_custom_call.1} parent=15 // pred_check_branch
          %206 = sbr.rel (%p204) target = $region24
        $region23: #{tpu_custom_call.1} parent=15 // pred_region
          %s207 = smul.u32 16, %s22
          %p208 = scmp.lt.s32.totalorder %s20, 1
          %s209 = scalar_select %p208, %s20, 1
          %p210 = scmp.lt.s32.totalorder %s207, 31
          %s211 = scalar_select %p210, %s207, 31
          %p212 = scmp.lt.s32.totalorder %s21, 0
          %s213 = scalar_select %p212, %s21, 0
          %s214 = sadd.s32 %s213, %s211
          %s215 = smul.addr %s209, 32
          %s216 = sadd.s32 %s214, %s215
          %s217 = smul.addr %s216, 4
          %s218 = scalar_lea.vmem %s1, %s217
          %s219 = smul.u32 16, %s22
        $region24: #{tpu_custom_call.1} parent=15 // pred_fallthru
          _
        // Predicated region
        $region25: #{tpu_custom_call.1} parent=15 // pred_check
          %p220 = pneg %p112
        $region26: #{tpu_custom_call.1} parent=15 // pred_check_branch
          %222 = sbr.rel (%p220) target = $region28
        $region27: #{tpu_custom_call.1} parent=15 // pred_region
          %s223 = smul.u32 16, %s22
          %p224 = scmp.lt.s32.totalorder %s20, 1
          %s225 = scalar_select %p224, %s20, 1
          %p226 = scmp.lt.s32.totalorder %s223, 31
          %s227 = scalar_select %p226, %s223, 31
          %s228 = smul.addr %s225, 32
          %s229 = sadd.s32 %s227, %s228
          %s230 = smul.addr %s229, 8
          %s231 = scalar_lea.vmem %s2, %s230
          %s232 = smul.u32 16, %s22
        $region28: #{tpu_custom_call.1} parent=15 // pred_fallthru
          _
        // Predicated region
        $region29: #{tpu_custom_call.1} parent=15 // pred_check
          %p233 = pneg %p140
        $region30: #{tpu_custom_call.1} parent=15 // pred_check_branch
          %235 = sbr.rel (%p233) target = $region32
        $region31: #{tpu_custom_call.1} parent=15 // pred_region
          %s236 = smul.u32 16, %s22
          %p237 = scmp.lt.s32.totalorder %s20, 1
          %s238 = scalar_select %p237, %s20, 1
          %p239 = scmp.lt.s32.totalorder %s236, 31
          %s240 = scalar_select %p239, %s236, 31
          %s241 = smul.addr %s238, 32
          %s242 = sadd.s32 %s240, %s241
          %s243 = smul.addr %s242, 4
          %s244 = scalar_lea.vmem %s3, %s243
          %s245 = smul.u32 16, %s22
        $region32: #{tpu_custom_call.1} parent=15 // pred_fallthru
          _
      $region16: #{tpu_custom_call.1} parent=5 // pred_fallthru
        _
      %p246 = scmp.le.s32.totalorder 1, %s13
      %p247 = scmp.lt.s32.totalorder %s13, 5
      %p248 = pnand %p246, %p247
      %p249 = pneg %p248
      // Predicated region
      $region33: #{tpu_custom_call.1} parent=5 // pred_check
        _
      $region34: #{tpu_custom_call.1} parent=5 // pred_check_branch
        %251 = sbr.rel (%p248) target = $region36
      $region35: #{tpu_custom_call.1} parent=5 // pred_region
        %s252 = ssub.s32 %s13, 1
        %p253 = scmp.lt.s32.totalorder %s23, 1
        %s254 = scalar_select %p253, %s23, 1
        %p255 = scmp.lt.s32.totalorder %s24, 0
        %s256 = scalar_select %p255, %s24, 0
        %s257 = smul.addr %s254, 4
        %s258 = sadd.s32 %s256, %s257
        %s259 = smul.addr %s258, 8
        %s260 = scalar_lea.vmem %s0, %s259
        %p261 = pneg %p60
        %p262 = pneg %p57
        %s263 = smul.u32 16, %s25
        %p264 = scmp.lt.s32.totalorder %s23, 1
        %s265 = scalar_select %p264, %s23, 1
        %p266 = scmp.lt.s32.totalorder %s263, 31
        %s267 = scalar_select %p266, %s263, 31
        %p268 = scmp.lt.s32.totalorder %s24, 0
        %s269 = scalar_select %p268, %s24, 0
        %s270 = sadd.s32 %s269, %s267
        %s271 = smul.addr %s265, 32
        %s272 = sadd.s32 %s270, %s271
        %s273 = smul.addr %s272, 4
        %s274 = scalar_lea.vmem %s1, %s273
        %p275 = pneg %p90
        %p276 = pneg %p87
        %s277 = smul.u32 16, %s25
        %p278 = scmp.lt.s32.totalorder %s23, 1
        %s279 = scalar_select %p278, %s23, 1
        %p280 = scmp.lt.s32.totalorder %s277, 31
        %s281 = scalar_select %p280, %s277, 31
        %s282 = smul.addr %s279, 32
        %s283 = sadd.s32 %s281, %s282
        %s284 = smul.addr %s283, 8
        %s285 = scalar_lea.vmem %s2, %s284
        %p286 = pneg %p118
        %p287 = pneg %p115
        %s288 = smul.u32 16, %s25
        %p289 = scmp.lt.s32.totalorder %s23, 1
        %s290 = scalar_select %p289, %s23, 1
        %p291 = scmp.lt.s32.totalorder %s288, 31
        %s292 = scalar_select %p291, %s288, 31
        %s293 = smul.addr %s290, 32
        %s294 = sadd.s32 %s292, %s293
        %s295 = smul.addr %s294, 4
        %s296 = scalar_lea.vmem %s3, %s295
        %p297 = pneg %p146
        %p298 = pneg %p143
        %p299 = pneg %p174
        %p300 = pneg %p171
        %s301 = sand.u32 %s161, 1
        %s302 = scalar_lea.sflag [#allocation4], %s301
        %s303 = sand.u32 %s161, 1
        %s304 = smul.addr %s303, 16
        %s305 = scalar_lea.vmem [#allocation3], %s304
        %p306 = scmp.lt.s32.totalorder %s23, 1
        %s307 = scalar_select %p306, %s23, 1
        %p308 = scmp.lt.s32.totalorder %s24, 0
        %s309 = scalar_select %p308, %s24, 0
        %s310 = smul.addr %s307, 4
        %s311 = sadd.s32 %s309, %s310
        %s312 = smul.addr %s311, 8
        %s313 = scalar_lea.vmem %s0, %s312
        %s314 = smul.u32 16, %s25
        %p315 = scmp.lt.s32.totalorder %s23, 1
        %s316 = scalar_select %p315, %s23, 1
        %p317 = scmp.lt.s32.totalorder %s314, 31
        %s318 = scalar_select %p317, %s314, 31
        %p319 = scmp.lt.s32.totalorder %s24, 0
        %s320 = scalar_select %p319, %s24, 0
        %s321 = sadd.s32 %s320, %s318
        %s322 = smul.addr %s316, 32
        %s323 = sadd.s32 %s321, %s322
        %s324 = smul.addr %s323, 4
        %s325 = scalar_lea.vmem %s1, %s324
        %s326 = smul.u32 16, %s25
        %s327 = smul.u32 16, %s25
        %p328 = scmp.lt.s32.totalorder %s23, 1
        %s329 = scalar_select %p328, %s23, 1
        %p330 = scmp.lt.s32.totalorder %s327, 31
        %s331 = scalar_select %p330, %s327, 31
        %s332 = smul.addr %s329, 32
        %s333 = sadd.s32 %s331, %s332
        %s334 = smul.addr %s333, 8
        %s335 = scalar_lea.vmem %s2, %s334
        %s336 = smul.u32 16, %s25
        %s337 = smul.u32 16, %s25
        %p338 = scmp.lt.s32.totalorder %s23, 1
        %s339 = scalar_select %p338, %s23, 1
        %p340 = scmp.lt.s32.totalorder %s337, 31
        %s341 = scalar_select %p340, %s337, 31
        %s342 = smul.addr %s339, 32
        %s343 = sadd.s32 %s341, %s342
        %s344 = smul.addr %s343, 4
        %s345 = scalar_lea.vmem %s3, %s344
        %s346 = smul.u32 16, %s25
        %p348 = scmp.eq.s32.totalorder %s25, 0
        // Predicated region
        $region37: #{tpu_custom_call.1} parent=35 // pred_check
          %p349 = pneg %p348
        $region38: #{tpu_custom_call.1} parent=35 // pred_check_branch
          %351 = sbr.rel (%p349) target = $region40
        $region39: #{tpu_custom_call.1} parent=35 // pred_region
          %352 = vst [vmem:[#allocation2] sm:$0xff] 0.0
          %353 = vst [vmem:[#allocation2 + $0x8] sm:$0xff] 0.0
          %354 = vst [vmem:[#allocation2 + $0x10] sm:$0xff] 0.0
          %355 = vst [vmem:[#allocation2 + $0x18] sm:$0xff] 0.0
        $region40: #{tpu_custom_call.1} parent=35 // pred_fallthru
          _
        %v356 = vld [vmem:[%s335] sm:$0xff]
        %v357 = vld [vmem:[%s335 + $0x8] sm:$0xff]
        %v358 = vld [vmem:[%s335 + $0x10] sm:$0xff]
        %v359 = vld [vmem:[%s335 + $0x18] sm:$0xff]
        %v360 = vld [vmem:[%s335 + $0x20] sm:$0xff]
        %v361 = vld [vmem:[%s335 + $0x28] sm:$0xff]
        %v362 = vld [vmem:[%s335 + $0x30] sm:$0xff]
        %v363 = vld [vmem:[%s335 + $0x38] sm:$0xff]
        %v364 = vld [vmem:[%s335 + $0x40] sm:$0xff]
        %v365 = vld [vmem:[%s335 + $0x48] sm:$0xff]
        %v366 = vld [vmem:[%s335 + $0x50] sm:$0xff]
        %v367 = vld [vmem:[%s335 + $0x58] sm:$0xff]
        %v368 = vld [vmem:[%s335 + $0x60] sm:$0xff]
        %v369 = vld [vmem:[%s335 + $0x68] sm:$0xff]
        %v370 = vld [vmem:[%s335 + $0x70] sm:$0xff]
        %v371 = vld [vmem:[%s335 + $0x78] sm:$0xff]
        %v372 = vld [vmem:[%s325] sm:$0xf]
        %v373 = vld [vmem:[%s325 + $0x4] sm:$0xf]
        %v374 = vld [vmem:[%s325 + $0x8] sm:$0xf]
        %v375 = vld [vmem:[%s325 + $0xc] sm:$0xf]
        %v376 = vld [vmem:[%s325 + $0x10] sm:$0xf]
        %v377 = vld [vmem:[%s325 + $0x14] sm:$0xf]
        %v378 = vld [vmem:[%s325 + $0x18] sm:$0xf]
        %v379 = vld [vmem:[%s325 + $0x1c] sm:$0xf]
        %v380 = vld [vmem:[%s325 + $0x20] sm:$0xf]
        %v381 = vld [vmem:[%s325 + $0x24] sm:$0xf]
        %v382 = vld [vmem:[%s325 + $0x28] sm:$0xf]
        %v383 = vld [vmem:[%s325 + $0x2c] sm:$0xf]
        %v384 = vld [vmem:[%s325 + $0x30] sm:$0xf]
        %v385 = vld [vmem:[%s325 + $0x34] sm:$0xf]
        %v386 = vld [vmem:[%s325 + $0x38] sm:$0xf]
        %v387 = vld [vmem:[%s325 + $0x3c] sm:$0xf]
        %v388 = vunpack.c.l.bf16 %v372
        %v389 = vunpack.c.l.bf16 %v373
        %v390 = vunpack.c.l.bf16 %v374
        %v391 = vunpack.c.l.bf16 %v375
        %v392 = vunpack.c.l.bf16 %v376
        %v393 = vunpack.c.l.bf16 %v377
        %v394 = vunpack.c.l.bf16 %v378
        %v395 = vunpack.c.l.bf16 %v379
        %v396 = vunpack.c.l.bf16 %v380
        %v397 = vunpack.c.l.bf16 %v381
        %v398 = vunpack.c.l.bf16 %v382
        %v399 = vunpack.c.l.bf16 %v383
        %v400 = vunpack.c.l.bf16 %v384
        %v401 = vunpack.c.l.bf16 %v385
        %v402 = vunpack.c.l.bf16 %v386
        %v403 = vunpack.c.l.bf16 %v387
        %405 = vset.pattern.permute.xlu0 0
        %406 = vperm.xlu0 %405, %v356
        %v407 = vpop.permute.xlu0 %406
        %410 = vset.pattern.permute.xlu0 0
        %411 = vperm.xlu0 %410, %v357
        %v412 = vpop.permute.xlu0 %411
        %415 = vset.pattern.permute.xlu0 0
        %416 = vperm.xlu0 %415, %v358
        %v417 = vpop.permute.xlu0 %416
        %420 = vset.pattern.permute.xlu0 0
        %421 = vperm.xlu0 %420, %v359
        %v422 = vpop.permute.xlu0 %421
        %425 = vset.pattern.permute.xlu0 0
        %426 = vperm.xlu0 %425, %v360
        %v427 = vpop.permute.xlu0 %426
        %430 = vset.pattern.permute.xlu0 0
        %431 = vperm.xlu0 %430, %v361
        %v432 = vpop.permute.xlu0 %431
        %435 = vset.pattern.permute.xlu0 0
        %436 = vperm.xlu0 %435, %v362
        %v437 = vpop.permute.xlu0 %436
        %440 = vset.pattern.permute.xlu0 0
        %441 = vperm.xlu0 %440, %v363
        %v442 = vpop.permute.xlu0 %441
        %445 = vset.pattern.permute.xlu0 0
        %446 = vperm.xlu0 %445, %v364
        %v447 = vpop.permute.xlu0 %446
        %450 = vset.pattern.permute.xlu0 0
        %451 = vperm.xlu0 %450, %v365
        %v452 = vpop.permute.xlu0 %451
        %455 = vset.pattern.permute.xlu0 0
        %456 = vperm.xlu0 %455, %v366
        %v457 = vpop.permute.xlu0 %456
        %460 = vset.pattern.permute.xlu0 0
        %461 = vperm.xlu0 %460, %v367
        %v462 = vpop.permute.xlu0 %461
        %465 = vset.pattern.permute.xlu0 0
        %466 = vperm.xlu0 %465, %v368
        %v467 = vpop.permute.xlu0 %466
        %470 = vset.pattern.permute.xlu0 0
        %471 = vperm.xlu0 %470, %v369
        %v472 = vpop.permute.xlu0 %471
        %475 = vset.pattern.permute.xlu0 0
        %476 = vperm.xlu0 %475, %v370
        %v477 = vpop.permute.xlu0 %476
        %480 = vset.pattern.permute.xlu0 0
        %481 = vperm.xlu0 %480, %v371
        %v482 = vpop.permute.xlu0 %481
        %v484 = vmul.f32 %v407, %v388
        %v485 = vmul.f32 %v412, %v389
        %v486 = vmul.f32 %v417, %v390
        %v487 = vmul.f32 %v422, %v391
        %v488 = vmul.f32 %v427, %v392
        %v489 = vmul.f32 %v432, %v393
        %v490 = vmul.f32 %v437, %v394
        %v491 = vmul.f32 %v442, %v395
        %v492 = vmul.f32 %v447, %v396
        %v493 = vmul.f32 %v452, %v397
        %v494 = vmul.f32 %v457, %v398
        %v495 = vmul.f32 %v462, %v399
        %v496 = vmul.f32 %v467, %v400
        %v497 = vmul.f32 %v472, %v401
        %v498 = vmul.f32 %v477, %v402
        %v499 = vmul.f32 %v482, %v403
        %v500 = vpack.c.bf16 %v485, %v484
        %v501 = vpack.c.bf16 %v487, %v486
        %v502 = vpack.c.bf16 %v489, %v488
        %v503 = vpack.c.bf16 %v491, %v490
        %v504 = vpack.c.bf16 %v493, %v492
        %v505 = vpack.c.bf16 %v495, %v494
        %v506 = vpack.c.bf16 %v497, %v496
        %v507 = vpack.c.bf16 %v499, %v498
        %v508 = vld [vmem:[#allocation2] sm:$0xff]
        %v509 = vld [vmem:[#allocation2 + $0x8] sm:$0xff]
        %v510 = vld [vmem:[#allocation2 + $0x10] sm:$0xff]
        %v511 = vld [vmem:[#allocation2 + $0x18] sm:$0xff]
        %v512 = vld [vmem:[%s345] sm:$0xf]
        %v513 = vld [vmem:[%s345 + $0x4] sm:$0xf]
        %v514 = vld [vmem:[%s345 + $0x8] sm:$0xf]
        %v515 = vld [vmem:[%s345 + $0xc] sm:$0xf]
        %v516 = vld [vmem:[%s345 + $0x10] sm:$0xf]
        %v517 = vld [vmem:[%s345 + $0x14] sm:$0xf]
        %v518 = vld [vmem:[%s345 + $0x18] sm:$0xf]
        %v519 = vld [vmem:[%s345 + $0x1c] sm:$0xf]
        %v520 = vld [vmem:[%s345 + $0x20] sm:$0xf]
        %v521 = vld [vmem:[%s345 + $0x24] sm:$0xf]
        %v522 = vld [vmem:[%s345 + $0x28] sm:$0xf]
        %v523 = vld [vmem:[%s345 + $0x2c] sm:$0xf]
        %v524 = vld [vmem:[%s345 + $0x30] sm:$0xf]
        %v525 = vld [vmem:[%s345 + $0x34] sm:$0xf]
        %v526 = vld [vmem:[%s345 + $0x38] sm:$0xf]
        %v527 = vld [vmem:[%s345 + $0x3c] sm:$0xf]
        %v544 = vunpack.c.l.b16 %v512
        %v545 = vunpack.c.l.b16 %v513
        %v546 = vunpack.c.l.b16 %v514
        %v547 = vunpack.c.l.b16 %v515
        %v548 = vunpack.c.l.b16 %v516
        %v549 = vunpack.c.l.b16 %v517
        %v550 = vunpack.c.l.b16 %v518
        %v551 = vunpack.c.l.b16 %v519
        %v552 = vunpack.c.l.b16 %v520
        %v553 = vunpack.c.l.b16 %v521
        %v554 = vunpack.c.l.b16 %v522
        %v555 = vunpack.c.l.b16 %v523
        %v556 = vunpack.c.l.b16 %v524
        %v557 = vunpack.c.l.b16 %v525
        %v558 = vunpack.c.l.b16 %v526
        %v559 = vunpack.c.l.b16 %v527
        %v560 = vpack.c.b16 %v545, %v544
        %v561 = vpack.c.b16 %v547, %v546
        %v562 = vpack.c.b16 %v549, %v548
        %v563 = vpack.c.b16 %v551, %v550
        %v564 = vpack.c.b16 %v553, %v552
        %v565 = vpack.c.b16 %v555, %v554
        %v566 = vpack.c.b16 %v557, %v556
        %v567 = vpack.c.b16 %v559, %v558
        %576 = vxpose.xlu0.c.b16.start [1/8] %v560, 128
        %577 = vxpose.xlu0.c.b16.cont [2/8] %v561, 128
        %578 = vxpose.xlu0.c.b16.cont [3/8] %v562, 128
        %579 = vxpose.xlu0.c.b16.cont [4/8] %v563, 128
        %580 = vxpose.xlu0.c.b16.cont [5/8] %v564, 128
        %581 = vxpose.xlu0.c.b16.cont [6/8] %v565, 128
        %582 = vxpose.xlu0.c.b16.cont [7/8] %v566, 128
        %583 = vxpose.xlu0.c.b16.end [8/8] %v567, 128
        %v584 = vpop.trf.xlu0
        %v585 = vpop.trf.xlu0
        %v586 = vpop.trf.xlu0
        %v587 = vpop.trf.xlu0
        %v588 = vpop.trf.xlu0
        %v589 = vpop.trf.xlu0
        %v590 = vpop.trf.xlu0
        %v591 = vpop.trf.xlu0
        %592 = vmatprep.subr.bf16.mxu0 0
        %593 = vmatpush1.bf16.msra.mxu0 %v500
        %594 = vmatprep.subr.bf16.mxu0 0
        %595 = vmatpush1.bf16.msra.mxu0 %v501
        %596 = vmatprep.subr.bf16.mxu0 0
        %597 = vmatpush1.bf16.msra.mxu0 %v502
        %598 = vmatprep.subr.bf16.mxu0 0
        %599 = vmatpush1.bf16.msra.mxu0 %v503
        %600 = vmatprep.subr.bf16.mxu0 0
        %601 = vmatpush1.bf16.msra.mxu0 %v504
        %602 = vmatprep.subr.bf16.mxu0 0
        %603 = vmatpush1.bf16.msra.mxu0 %v505
        %604 = vmatprep.subr.bf16.mxu0 0
        %605 = vmatpush1.bf16.msra.mxu0 %v506
        %606 = vmatprep.subr.bf16.mxu0 0
        %607 = vmatpush1.bf16.msra.mxu0 %v507
        %608 = vmatprep.subr.bf16.mxu0 0
        %609 = vmatpush1.bf16.msra.mxu0 0
        %610 = vmatprep.subr.bf16.mxu0 0
        %611 = vmatpush1.bf16.msra.mxu0 0
        %612 = vmatprep.subr.bf16.mxu0 0
        %613 = vmatpush1.bf16.msra.mxu0 0
        %614 = vmatprep.subr.bf16.mxu0 0
        %615 = vmatpush1.bf16.msra.mxu0 0
        %616 = vmatprep.subr.bf16.mxu0 0
        %617 = vmatpush1.bf16.msra.mxu0 0
        %618 = vmatprep.subr.bf16.mxu0 0
        %619 = vmatpush1.bf16.msra.mxu0 0
        %620 = vmatprep.subr.bf16.mxu0 0
        %621 = vmatpush1.bf16.msra.mxu0 0
        %622 = vmatprep.subr.bf16.mxu0 0
        %623 = vmatpush1.bf16.msra.mxu0 0
        %624 = vmatprep.mubr.bf16.mxu0 0
        %625 = vmatmul.mubr.bf16.gmra.mrb[0].mxu0 %v584
        %v626 = vpop.f32.mrb[0].mxu0
        %v627 = vadd.f32 0.0, %v626
        %v628 = vpop.f32.mrb[0].mxu0
        %v629 = vpop.f32.mrb[0].mxu0
        %v630 = vadd.f32 0.0, %v629
        %v631 = vpop.f32.mrb[0].mxu0
        %632 = vmatprep.mubr.bf16.mxu0 0
        %633 = vmatmul.mubr.bf16.gmra.mrb[0].mxu0 %v585
        %v634 = vpop.f32.mrb[0].mxu0
        %v635 = vadd.f32 0.0, %v634
        %v636 = vpop.f32.mrb[0].mxu0
        %v637 = vpop.f32.mrb[0].mxu0
        %v638 = vadd.f32 0.0, %v637
        %v639 = vpop.f32.mrb[0].mxu0
        %640 = vdwg.mxu0
        %v641 = vadd.f32 %v508, %v627
        %v642 = vadd.f32 %v509, %v630
        %v643 = vadd.f32 %v510, %v635
        %v644 = vadd.f32 %v511, %v638
        %645 = vst [vmem:[#allocation2] sm:$0xff] %v641
        %646 = vst [vmem:[#allocation2 + $0x8] sm:$0xff] %v642
        %647 = vst [vmem:[#allocation2 + $0x10] sm:$0xff] %v643
        %648 = vst [vmem:[#allocation2 + $0x18] sm:$0xff] %v644
        %p649 = scmp.eq.s32.totalorder %s25, 1
        // Predicated region
        $region41: #{tpu_custom_call.1} parent=35 // pred_check
          %p650 = pneg %p649
        $region42: #{tpu_custom_call.1} parent=35 // pred_check_branch
          %652 = sbr.rel (%p650) target = $region44
        $region43: #{tpu_custom_call.1} parent=35 // pred_region
          %v653 = vld [vmem:[%s313] sm:$0xff]
          %v654 = vld [vmem:[%s313 + $0x8] sm:$0xff]
          %v655 = vld [vmem:[%s313 + $0x10] sm:$0xff]
          %v656 = vld [vmem:[%s313 + $0x18] sm:$0xff]
          %v657 = vld [vmem:[#allocation2] sm:$0xff]
          %v658 = vld [vmem:[#allocation2 + $0x8] sm:$0xff]
          %v659 = vld [vmem:[#allocation2 + $0x10] sm:$0xff]
          %v660 = vld [vmem:[#allocation2 + $0x18] sm:$0xff]
          %v661 = vmul.f32 %v653, %v657
          %v662 = vmul.f32 %v654, %v658
          %v663 = vmul.f32 %v655, %v659
          %v664 = vmul.f32 %v656, %v660
          %v665 = vpack.c.bf16 %v662, %v661
          %v666 = vpack.c.bf16 %v664, %v663
          %v669 = vunpack.c.l.b16 %v665
          %v670 = vunpack.c.h.b16 %v665
          %v671 = vunpack.c.l.b16 %v666
          %v672 = vunpack.c.h.b16 %v666
          %v673 = vpack.c.b16 %v669, %v669
          %v674 = vpack.c.b16 %v670, %v670
          %v675 = vpack.c.b16 %v671, %v671
          %v676 = vpack.c.b16 %v672, %v672
          %681 = vst [vmem:[%s305] sm:$0xf] %v673
          %682 = vst [vmem:[%s305 + $0x4] sm:$0xf] %v674
          %683 = vst [vmem:[%s305 + $0x8] sm:$0xf] %v675
          %684 = vst [vmem:[%s305 + $0xc] sm:$0xf] %v676
        $region44: #{tpu_custom_call.1} parent=35 // pred_fallthru
          _
        %s685 = sand.u32 %s161, 1
        %s686 = scalar_lea.sflag [#allocation4], %s685
        %s687 = sand.u32 %s161, 1
        %s688 = smul.addr %s687, 16
        %s689 = scalar_lea.vmem [#allocation3], %s688
        // Predicated region
        $region45: #{tpu_custom_call.1} parent=35 // pred_check
          %p690 = pneg %p171
        $region46: #{tpu_custom_call.1} parent=35 // pred_check_branch
          %692 = sbr.rel (%p690) target = $region48
        $region47: #{tpu_custom_call.1} parent=35 // pred_region
          %s694 = ssub.s32 256, 256
          %695 = vsyncadd %s686, %s694
          %s696 = smul.addr %s23, 4
          %s697 = sadd.s32 %s24, %s696
          %s698 = smul.addr %s697, 64
          %s699 = scalar_lea.hbm %s4, %s698
          %s700 = sshll.u32 %s689, 4
          %s701 = int_to_ptr.vmem [resolvable:$true] %s700
          %706 = dma.vmem_to_hbm [thread:$0]  %s701, 256, %s699, %s686, 64, 64, 4
        $region48: #{tpu_custom_call.1} parent=35 // pred_fallthru
          _
      $region36: #{tpu_custom_call.1} parent=5 // pred_fallthru
        _
      %p707 = scmp.le.s32.totalorder 2, %s13
      // Predicated region
      $region49: #{tpu_custom_call.1} parent=5 // pred_check
        %p708 = pneg %p707
      $region50: #{tpu_custom_call.1} parent=5 // pred_check_branch
        %710 = sbr.rel (%p708) target = $region52
      $region51: #{tpu_custom_call.1} parent=5 // pred_region
        %s711 = ssub.s32 %s13, 2
        // Predicated region
        $region53: #{tpu_custom_call.1} parent=51 // pred_check
          %p712 = pneg %p177
        $region54: #{tpu_custom_call.1} parent=51 // pred_check_branch
          %714 = sbr.rel (%p712) target = $region56
        $region55: #{tpu_custom_call.1} parent=51 // pred_region
          %s715 = sand.u32 %s162, 1
          %s716 = scalar_lea.sflag [#allocation4], %s715
          %s717 = sand.u32 %s162, 1
          %s718 = smul.addr %s717, 16
          %s719 = scalar_lea.vmem [#allocation3], %s718
          %720 = dma.done %s716, 256
        $region56: #{tpu_custom_call.1} parent=51 // pred_fallthru
          _
      $region52: #{tpu_custom_call.1} parent=5 // pred_fallthru
        _
    $region6: #{tpu_custom_call.1} parent=1 // loop_footer
      %s17 = sadd.s32 1, %s13
    $region7: #{tpu_custom_call.1} parent=1 // loop_footer_branch
      %12 = sbr.rel target = $region3
    $region8: #{tpu_custom_call.1} parent=1 // loop_exit
      _
    %721 = vsyncpa [#allocation4], 1
    %s722 = scalar_lea.sflag [#allocation4], 1
    %723 = vsyncpa %s722, 1

</llo_original>
